<compile_context>
chip_gen: v5e
topology: v5e:2x2
jax: 0.10.0
libtpu: 0.0.40
codegen_flags: <defaults>
</compile_context>

<pallas_src>
from functools import partial

import numpy as np
import jax
import jax.numpy as jnp
from jax.experimental import pallas as pl
from jax.experimental.pallas import tpu as pltpu


def _side_encoder_kernel(tp_ref, tab_ref, out_ref):
    # tp_ref:  (1, n_blk)   one batch row's (lane-padded) positions tile
    # tab_ref: (D, 2)       col 0: inv_freq = 10000 ** (-(2*(d//2)) / D)
    #                       col 1: phase    = 0 (even d) or pi/2 (odd d)
    # out_ref: (D, n_blk)   embedding tile, D on sublanes, L lane-dense
    inv_freq = tab_ref[:, 0:1]                                 # (D, 1)
    phase = tab_ref[:, 1:2]                                    # (D, 1)
    # One transcendental per output element; cos folded in via phase.
    # (jnp.sin lowers to VALU range-reduction + polynomial; for provably
    #  bounded angles a fixed low-degree odd polynomial would halve VALU work.)
    out_ref[...] = jnp.sin(inv_freq * tp_ref[...] + phase)     # (D, n_blk)


@partial(jax.jit, static_argnums=(1,), static_argnames=("max_lane_tile",))
def side_encoder_forward(tp, time_emb_dim, *, max_lane_tile=2048):
    """tp: (B, L) float32 -> side_emb: (B, D, 1, L) float32."""
    B, L = tp.shape
    D = int(time_emb_dim)

    # Lane-dense padding of the sequence axis (unmasked full-lane vst);
    # tile it only if a single row exceeds max_lane_tile lanes.
    L_pad = max(128, ((L + 127) // 128) * 128)
    if L_pad <= max_lane_tile:
        n_blk = L_pad
    else:
        L_pad = ((L_pad + max_lane_tile - 1) // max_lane_tile) * max_lane_tile
        n_blk = max_lane_tile
    grid = (B, L_pad // n_blk)

    tp_p = jnp.pad(tp.astype(jnp.float32), ((0, 0), (0, L_pad - L)))
    tp_p = tp_p.reshape(B, 1, L_pad)

    # Per-channel frequency/phase table, constant-folded at trace time (numpy).
    d = np.arange(D)
    two_k = 2.0 * (d // 2)                                     # 2 * (d // 2)
    inv_freq = np.exp(-(two_k / float(D)) * np.log(10000.0)).astype(np.float32)
    phase = ((d % 2) * (np.pi / 2.0)).astype(np.float32)
    tab = jnp.asarray(np.stack([inv_freq, phase], axis=1))     # (D, 2)

    out = pl.pallas_call(
        _side_encoder_kernel,
        out_shape=jax.ShapeDtypeStruct((B, D, L_pad), jnp.float32),
        grid_spec=pltpu.PrefetchScalarGridSpec(
            num_scalar_prefetch=0,
            grid=grid,
            in_specs=[
                # one batch row of positions per step, squeezed to (1, n_blk)
                pl.BlockSpec((pl.Squeezed(), 1, n_blk), lambda b, j: (b, 0, j)),
                # tiny resident freq/phase table
                pl.BlockSpec((D, 2), lambda b, j: (0, 0)),
            ],
            out_specs=pl.BlockSpec((pl.Squeezed(), D, n_blk),
                                   lambda b, j: (b, 0, j)),
        ),
        compiler_params=pltpu.CompilerParams(
            dimension_semantics=("parallel", "parallel")),
        cost_estimate=pl.CostEstimate(
            flops=2 * B * D * L_pad,
            transcendentals=B * D * L_pad,
            bytes_accessed=(B * D * L_pad + B * L_pad + 2 * D) * 4),
    )(tp_p, tab)

    # (B, D, L_pad) -> slice lane padding -> (B, D, 1, L).  No transpose.
    return out[:, :, :L][:, :, None, :]


def _reference(tp, D):
    # Pure-JAX reference mirroring the PyTorch module exactly.
    pos = tp[..., None]                                              # (B, L, 1)
    div_term = 1.0 / jnp.power(
        10000.0, jnp.arange(0, D, 2, dtype=jnp.float32) / D)
    pe = jnp.zeros((tp.shape[0], tp.shape[1], D), jnp.float32)
    pe = pe.at[:, :, 0::2].set(jnp.sin(pos * div_term))
    pe = pe.at[:, :, 1::2].set(jnp.cos(pos * div_term))
    return jnp.transpose(pe[:, :, None, :], (0, 3, 2, 1))            # (B, D, 1, L)


if __name__ == "__main__":
    B, L, D = 2, 8, 32                           # configs['time_emb'] = 32
    key = jax.random.PRNGKey(0)
    tp = jax.random.uniform(key, (B, L), dtype=jnp.float32, minval=0.0, maxval=1.0)

    out = side_encoder_forward(tp, D)
    out = jax.block_until_ready(out)

    ref = _reference(tp, D)
    assert out.shape == (B, D, 1, L), out.shape
    assert jnp.allclose(out, ref, atol=1e-5, rtol=1e-5), "mismatch vs reference"

    print("KERNEL_OK")
</pallas_src>

<mosaic_0001>
module attributes {stable_mosaic.version = 11 : i64} {
  func.func @_side_encoder_kernel(%arg0: i32, %arg1: i32, %arg2: memref<1x1x128xf32, #tpu.memory_space<vmem>>, %arg3: memref<32x2xf32, #tpu.memory_space<vmem>>, %arg4: memref<1x32x128xf32, #tpu.memory_space<vmem>>) attributes {dimension_semantics = [#tpu.dimension_semantics<parallel>, #tpu.dimension_semantics<parallel>], iteration_bounds = array<i64: 2, 1>, scalar_prefetch = 0 : i64, scratch_operands = 0 : i64, tpu.core_type = #tpu.core_type<tc>, window_params = [{transform_indices = @transform_0, window_bounds = array<i64: 1, 1, 128>}, {pipeline_mode = #tpu.pipeline_mode<synchronous>, transform_indices = @transform_1, window_bounds = array<i64: 32, 2>}, {transform_indices = @transform_2, window_bounds = array<i64: 1, 32, 128>}]} {
    %c0 = arith.constant 0 : index
    %c0_0 = arith.constant 0 : index
    %0 = vector.load %arg3[%c0, %c0_0] : memref<32x2xf32, #tpu.memory_space<vmem>>, vector<32x1xf32>
    %c0_1 = arith.constant 0 : index
    %c1 = arith.constant 1 : index
    %1 = vector.load %arg3[%c0_1, %c1] : memref<32x2xf32, #tpu.memory_space<vmem>>, vector<32x1xf32>
    %c0_2 = arith.constant 0 : index
    %c0_3 = arith.constant 0 : index
    %c0_4 = arith.constant 0 : index
    %2 = vector.load %arg2[%c0_2, %c0_3, %c0_4] : memref<1x1x128xf32, #tpu.memory_space<vmem>>, vector<1x1x128xf32>
    %3 = vector.shape_cast %2 : vector<1x1x128xf32> to vector<1x128xf32>
    %4 = vector.broadcast %0 : vector<32x1xf32> to vector<32x128xf32>
    %5 = vector.broadcast %3 : vector<1x128xf32> to vector<32x128xf32>
    %6 = arith.mulf %4, %5 : vector<32x128xf32>
    %7 = vector.broadcast %1 : vector<32x1xf32> to vector<32x128xf32>
    %8 = arith.addf %6, %7 : vector<32x128xf32>
    %9 = math.sin %8 : vector<32x128xf32>
    %c0_5 = arith.constant 0 : index
    %c0_6 = arith.constant 0 : index
    %c0_7 = arith.constant 0 : index
    %10 = vector.load %arg4[%c0_5, %c0_6, %c0_7] : memref<1x32x128xf32, #tpu.memory_space<vmem>>, vector<1x32x128xf32>
    %11 = vector.shape_cast %10 : vector<1x32x128xf32> to vector<32x128xf32>
    %12 = vector.shape_cast %9 : vector<32x128xf32> to vector<1x32x128xf32>
    tpu.vector_store %arg4[%c0_5, %c0_6, %c0_7], %12 {strides = array<i32>} : memref<1x32x128xf32, #tpu.memory_space<vmem>>, vector<1x32x128xf32>,
    return
  }
  func.func @transform_0(%arg0: i32, %arg1: i32) -> (i32, i32, i32) {
    %c0_i32 = arith.constant 0 : i32
    %c0_i32_0 = arith.constant 0 : i32
    return %arg0, %c0_i32, %arg1 : i32, i32, i32
  }
  func.func @transform_1(%arg0: i32, %arg1: i32) -> (i32, i32) {
    %c0_i32 = arith.constant 0 : i32
    %c0_i32_0 = arith.constant 0 : i32
    %c0_i32_1 = arith.constant 0 : i32
    return %c0_i32, %c0_i32_0 : i32, i32
  }
  func.func @transform_2(%arg0: i32, %arg1: i32) -> (i32, i32, i32) {
    %c0_i32 = arith.constant 0 : i32
    %c0_i32_0 = arith.constant 0 : i32
    return %arg0, %c0_i32, %arg1 : i32, i32, i32
  }
}

</mosaic_0001>

<llo_original>
// kernel: side_encoder_forward.1
$region0: #{side_encoder_forward.1}
  #allocation0 [shape = 'u32[]', space=smem, size = 0x4, offset = 0x4, fixed_abs, tag = 'smem constant byte address 0x4 - core index']
  #allocation1 [shape = 'u32[72,128]{1,0:T(1,128)}', space=vmem, size = 0x9000, scoped, tag = 'internal scratch']
  %s0 = inlined_call_operand.vmem [shape: f32[2,1,128], index: 0, kind: input, shape index: {}]
  %s1 = inlined_call_operand.hbm [shape: f32[32,2], index: 1, kind: input, shape index: {}]
  %s2 = inlined_call_operand.vmem [shape: f32[2,32,128], index: 2, kind: output, shape index: {}]
  %s3 = sld [smem:[#allocation0]]
  $region45: #{side_encoder_forward.1} parent=0
    _
  %s5 = ssub.s32 1, %s3
  %s6 = scalar_select 0, %s5, %s3
  $region1: #{side_encoder_forward.1} parent=0
    #allocation2 [shape = 'u8[16384]{0}', space=vmem, size = 0x4000, scoped, tag = 'input window, operand 1, single buffered']
    #allocation3 [shape = 's32[2]{0}', space=sflag, size = 0x8, scoped, tag = 'scoped memory for side_encoder_forward.1']
    %7 = vsyncpa [#allocation3], 0
    loop: start=0, step=1, limit=4
    $region2: #{side_encoder_forward.1} parent=1 // loop_pre_header
      _
    $region3: #{side_encoder_forward.1} parent=1 // loop_header
      %s9 = sphi 0, %s13
      %p10 = scmp.ge.s32.totalorder %s9, 4
      %s16 = sphi 0, %s28
      %s17 = sphi 0, %s24
      %s18 = sphi 0, %s16
      %s19 = sphi 0, %s17
      %s20 = sphi 0, %s18
      %s21 = sphi 0, %s19
      %s33 = sphi 0, %s35
      %s36 = sphi 0, %s33
      %s37 = sphi 0, %s36
      %s53 = sphi 0, %s37
      %s57 = sphi 0, %s57
      %s59 = sphi 0, %s57
      %s60 = sphi 0, %s59
      %s74 = sphi 0, %s60
      %s82 = sphi 0, %s84
      %s85 = sphi 0, %s82
      %s86 = sphi 0, %s85
      %s102 = sphi 0, %s86
    $region4: #{side_encoder_forward.1} parent=1 // loop_header_branch
      %12 = sbr.rel (%p10) target = $region8
    $region5: #{side_encoder_forward.1} parent=1 // loop_body
      %s14 = ssub.s32 %s9, 1
      %s15 = ssub.s32 %s9, 2
      %s22 = sadd.s32 1, %s17
      %p23 = scmp.ge.s32.totalorder %s22, 1
      %s24 = scalar_select %p23, 0, %s22
      %s25 = sadd.s32 1, %s16
      %s26 = scalar_select %p23, %s25, %s16
      %p27 = scmp.ge.s32.totalorder %s26, 2
      %s28 = scalar_select %p27, 0, %s26
      %s29 = ssub.s32 %s16, %s28
      %s30 = ssub.s32 %s17, %s24
      %s31 = sor.u32 %s29, %s30
      %p32 = scmp.eq.s32.totalorder %s31, 0
      %s34 = sadd.s32 %s33, 1
      %s35 = scalar_select %p32, %s33, %s34
      %p38 = pneg %p32
      %p39 = scmp.eq.s32.totalorder %s9, 1
      %p40 = por %p38, %p39
      %p41 = scmp.ne.s32.totalorder %s33, %s36
      %p42 = scmp.eq.s32.totalorder %s9, 0
      %p43 = por %p41, %p42
      %p44 = scmp.ne.s32.totalorder %s33, %s36
      %p45 = scmp.eq.s32.totalorder %s14, 1
      %p46 = por %p44, %p45
      %p47 = scmp.ne.s32.totalorder %s36, %s37
      %p48 = scmp.eq.s32.totalorder %s14, 0
      %p49 = por %p47, %p48
      %p50 = scmp.ne.s32.totalorder %s36, %s37
      %p51 = scmp.eq.s32.totalorder %s15, 1
      %p52 = por %p50, %p51
      %p54 = scmp.ne.s32.totalorder %s37, %s53
      %p55 = scmp.eq.s32.totalorder %s15, 0
      %p56 = por %p54, %p55
      %s58 = sadd.s32 %s57, 1
      %p61 = scmp.eq.s32.totalorder %s9, 1
      %p62 = scmp.ne.s32.totalorder %s57, %s59
      %p63 = scmp.eq.s32.totalorder %s9, 0
      %p64 = por %p62, %p63
      %p65 = scmp.ne.s32.totalorder %s57, %s59
      %p66 = scmp.eq.s32.totalorder %s14, 1
      %p67 = por %p65, %p66
      %p68 = scmp.ne.s32.totalorder %s59, %s60
      %p69 = scmp.eq.s32.totalorder %s14, 0
      %p70 = por %p68, %p69
      %p71 = scmp.ne.s32.totalorder %s59, %s60
      %p72 = scmp.eq.s32.totalorder %s15, 1
      %p73 = por %p71, %p72
      %p75 = scmp.ne.s32.totalorder %s60, %s74
      %p76 = scmp.eq.s32.totalorder %s15, 0
      %p77 = por %p75, %p76
      %s78 = ssub.s32 %s16, %s28
      %s79 = ssub.s32 %s17, %s24
      %s80 = sor.u32 %s78, %s79
      %p81 = scmp.eq.s32.totalorder %s80, 0
      %s83 = sadd.s32 %s82, 1
      %s84 = scalar_select %p81, %s82, %s83
      %p87 = pneg %p81
      %p88 = scmp.eq.s32.totalorder %s9, 1
      %p89 = por %p87, %p88
      %p90 = scmp.ne.s32.totalorder %s82, %s85
      %p91 = scmp.eq.s32.totalorder %s9, 0
      %p92 = por %p90, %p91
      %p93 = scmp.ne.s32.totalorder %s82, %s85
      %p94 = scmp.eq.s32.totalorder %s14, 1
      %p95 = por %p93, %p94
      %p96 = scmp.ne.s32.totalorder %s85, %s86
      %p97 = scmp.eq.s32.totalorder %s14, 0
      %p98 = por %p96, %p97
      %p99 = scmp.ne.s32.totalorder %s85, %s86
      %p100 = scmp.eq.s32.totalorder %s15, 1
      %p101 = por %p99, %p100
      %p103 = scmp.ne.s32.totalorder %s86, %s102
      %p104 = scmp.eq.s32.totalorder %s15, 0
      %p105 = por %p103, %p104
      %p106 = scmp.le.s32.totalorder 1, %s9
      %p107 = scmp.lt.s32.totalorder %s9, 3
      %p108 = pnand %p106, %p107
      %p109 = pneg %p108
      // Predicated region
      $region9: #{side_encoder_forward.1} parent=5 // pred_check
        _
      $region10: #{side_encoder_forward.1} parent=5 // pred_check_branch
        %111 = sbr.rel (%p108) target = $region12
      $region11: #{side_encoder_forward.1} parent=5 // pred_region
        %s112 = ssub.s32 %s9, 1
        // Predicated region
        $region13: #{side_encoder_forward.1} parent=11 // pred_check
          %p113 = pneg %p70
        $region14: #{side_encoder_forward.1} parent=11 // pred_check_branch
          %115 = sbr.rel (%p113) target = $region16
        $region15: #{side_encoder_forward.1} parent=11 // pred_region
          %117 = vsyncadd [#allocation3], 0
          %s118 = sshll.u32 %s1, 4
          %s119 = int_to_ptr.hbm [resolvable:$true] %s118
          %s120 = sshll.u32 [#allocation2], 4
          %s121 = int_to_ptr.vmem [resolvable:$true] %s120
          %126 = dma.hbm_to_vmem [thread:$0]  %s119, 512, %s121, [#allocation3], 128, 128, 8
        $region16: #{side_encoder_forward.1} parent=11 // pred_fallthru
          _
      $region12: #{side_encoder_forward.1} parent=5 // pred_fallthru
        _
      %p127 = scmp.lt.s32.totalorder %s9, 2
      // Predicated region
      $region17: #{side_encoder_forward.1} parent=5 // pred_check
        %p128 = pneg %p127
      $region18: #{side_encoder_forward.1} parent=5 // pred_check_branch
        %130 = sbr.rel (%p128) target = $region20
      $region19: #{side_encoder_forward.1} parent=5 // pred_region
        // Predicated region
        $region21: #{side_encoder_forward.1} parent=19 // pred_check
          %p131 = pneg %p43
        $region22: #{side_encoder_forward.1} parent=19 // pred_check_branch
          %133 = sbr.rel (%p131) target = $region24
        $region23: #{side_encoder_forward.1} parent=19 // pred_region
          %p134 = scmp.lt.s32.totalorder %s16, 1
          %s135 = scalar_select %p134, %s16, 1
          %p136 = scmp.lt.s32.totalorder %s17, 0
          %s137 = scalar_select %p136, %s17, 0
          %s138 = sadd.s32 %s137, %s135
          %s139 = scalar_lea.vmem %s0, %s138
        $region24: #{side_encoder_forward.1} parent=19 // pred_fallthru
          _
      $region20: #{side_encoder_forward.1} parent=5 // pred_fallthru
        _
      %p140 = scmp.le.s32.totalorder 1, %s9
      %p141 = scmp.lt.s32.totalorder %s9, 3
      %p142 = pnand %p140, %p141
      %p143 = pneg %p142
      // Predicated region
      $region25: #{side_encoder_forward.1} parent=5 // pred_check
        _
      $region26: #{side_encoder_forward.1} parent=5 // pred_check_branch
        %145 = sbr.rel (%p142) target = $region28
      $region27: #{side_encoder_forward.1} parent=5 // pred_region
        %s146 = ssub.s32 %s9, 1
        // Predicated region
        $region29: #{side_encoder_forward.1} parent=27 // pred_check
          %p147 = pneg %p70
        $region30: #{side_encoder_forward.1} parent=27 // pred_check_branch
          %149 = sbr.rel (%p147) target = $region32
        $region31: #{side_encoder_forward.1} parent=27 // pred_region
          %151 = dma.done [#allocation3], 512
        $region32: #{side_encoder_forward.1} parent=27 // pred_fallthru
          _
        %p152 = scmp.lt.s32.totalorder %s18, 1
        %s153 = scalar_select %p152, %s18, 1
        %p154 = scmp.lt.s32.totalorder %s19, 0
        %s155 = scalar_select %p154, %s19, 0
        %s156 = sadd.s32 %s155, %s153
        %s157 = scalar_lea.vmem %s0, %s156
        %p158 = pneg %p49
        %p159 = pneg %p46
        %p160 = pneg %p70
        %p161 = pneg %p67
        %p162 = pneg %p98
        %p163 = pneg %p95
        %p164 = scmp.lt.s32.totalorder %s18, 1
        %s165 = scalar_select %p164, %s18, 1
        %p166 = scmp.lt.s32.totalorder %s19, 0
        %s167 = scalar_select %p166, %s19, 0
        %s168 = smul.addr %s165, 4
        %s169 = sadd.s32 %s167, %s168
        %s170 = smul.addr %s169, 8
        %s171 = scalar_lea.vmem %s2, %s170
        %p172 = scmp.lt.s32.totalorder %s18, 1
        %s173 = scalar_select %p172, %s18, 1
        %p174 = scmp.lt.s32.totalorder %s19, 0
        %s175 = scalar_select %p174, %s19, 0
        %s176 = sadd.s32 %s175, %s173
        %s177 = scalar_lea.vmem %s0, %s176
        %p178 = scmp.lt.s32.totalorder %s18, 1
        %s179 = scalar_select %p178, %s18, 1
        %p180 = scmp.lt.s32.totalorder %s19, 0
        %s181 = scalar_select %p180, %s19, 0
        %s182 = smul.addr %s179, 4
        %s183 = sadd.s32 %s181, %s182
        %s184 = smul.addr %s183, 8
        %s185 = scalar_lea.vmem %s2, %s184
        %v186 = vld [vmem:[#allocation2] sm:$0xff]
        %v187 = vld [vmem:[#allocation2 + $0x8] sm:$0xff]
        %v188 = vld [vmem:[#allocation2 + $0x10] sm:$0xff]
        %v189 = vld [vmem:[#allocation2 + $0x18] sm:$0xff]
        %v190 = vld [vmem:[%s177] sm:$0x1]
        %192 = vset.pattern.permute.xlu0 0
        %193 = vperm.xlu0 %192, %v186
        %v194 = vpop.permute.xlu0 %193
        %197 = vset.pattern.permute.xlu0 0
        %198 = vperm.xlu0 %197, %v187
        %v199 = vpop.permute.xlu0 %198
        %202 = vset.pattern.permute.xlu0 0
        %203 = vperm.xlu0 %202, %v188
        %v204 = vpop.permute.xlu0 %203
        %207 = vset.pattern.permute.xlu0 0
        %208 = vperm.xlu0 %207, %v189
        %v209 = vpop.permute.xlu0 %208
        %v212 = vperm.slane %v190, 0
        %v214 = vmul.f32 %v194, %v212
        %v215 = vmul.f32 %v199, %v212
        %v216 = vmul.f32 %v204, %v212
        %v217 = vmul.f32 %v209, %v212
        %218 = vset.pattern.permute.xlu0 1
        %219 = vperm.xlu0 %218, %v186
        %v220 = vpop.permute.xlu0 %219
        %222 = vset.pattern.permute.xlu0 1
        %223 = vperm.xlu0 %222, %v187
        %v224 = vpop.permute.xlu0 %223
        %226 = vset.pattern.permute.xlu0 1
        %227 = vperm.xlu0 %226, %v188
        %v228 = vpop.permute.xlu0 %227
        %230 = vset.pattern.permute.xlu0 1
        %231 = vperm.xlu0 %230, %v189
        %v232 = vpop.permute.xlu0 %231
        %v234 = vadd.f32 %v214, %v220
        %v235 = vadd.f32 %v215, %v224
        %v236 = vadd.f32 %v216, %v228
        %v237 = vadd.f32 %v217, %v232
        %v238 = vand.u32 2147483647, %v234
        %vm239 = vcmp.le.f32.partialorder %v238, 0.7853982
        %vm240 = vcmp.lt.s32.totalorder %v234, 0
        %v241 = vand.u32 %v234, 2139095040
        %v242 = vshrl.u32 %v241, 23
        %v243 = vsub.s32 %v242, 127
        %v244 = vand.u32 2147483647, %v234
        %v245 = vand.u32 %v244, 8388607
        %v246 = vor.u32 %v245, 8388608
        %v247 = vsub.s32 0, %v246
        %v248 = vadd.s32 %v243, 1
        %vm249 = vcmp.gt.s32.totalorder %v248, 0
        %v250 = vsel %vm249, %v248, 0
        %v251 = vshrl.u32 %v250, 5
        %v252 = vand.u32 %v250, 31
        %v253 = vsub.s32 32, %v252
        %v254 = vshrl.u32 683565275, %v253
        %v255 = vshll.u32 683565275, %v252
        %v256 = vshrl.u32 2475754826, %v253
        %v257 = vor.u32 %v255, %v256
        %v258 = vshll.u32 2475754826, %v252
        %v259 = vshrl.u32 2131351028, %v253
        %v260 = vor.u32 %v258, %v259
        %v261 = vshll.u32 2131351028, %v252
        %v262 = vshrl.u32 2102212464, %v253
        %v263 = vor.u32 %v261, %v262
        %v264 = vshll.u32 2102212464, %v252
        %v265 = vshrl.u32 920167782, %v253
        %v266 = vor.u32 %v264, %v265
        %v267 = vshll.u32 920167782, %v252
        %v268 = vshrl.u32 1326507024, %v253
        %v269 = vor.u32 %v267, %v268
        %vm270 = vcmp.lt.s32.totalorder %v251, 1
        %vm271 = vcmp.lt.s32.totalorder %v251, 2
        %vm272 = vcmp.lt.s32.totalorder %v251, 3
        %vm273 = vcmp.lt.s32.totalorder %v251, 4
        %v274 = vsel %vm270, %v254, %v257
        %v275 = vsel %vm273, %v263, 2102212464
        %v276 = vsel %vm272, %v260, %v275
        %v277 = vsel %vm271, %v274, %v276
        %v278 = vsel %vm270, %v257, %v260
        %v279 = vsel %vm273, %v266, 920167782
        %v280 = vsel %vm272, %v263, %v279
        %v281 = vsel %vm271, %v278, %v280
        %v282 = vsel %vm270, %v260, %v263
        %v283 = vsel %vm273, %v269, 1326507024
        %v284 = vsel %vm272, %v266, %v283
        %v285 = vsel %vm271, %v282, %v284
        %v286 = vshll.u32 %v246, 8
        %v287 = vand.u32 %v286, 65535
        %v288 = vshrl.u32 %v286, 16
        %v289 = vand.u32 %v285, 65535
        %v290 = vshrl.u32 %v285, 16
        %v291 = vmul.u32 %v287, %v289
        %v292 = vmul.u32 %v287, %v290
        %v293 = vmul.u32 %v288, %v289
        %v294 = vmul.u32 %v288, %v290
        %v295 = vshll.u32 %v292, 16
        %v296 = vshrl.u32 %v292, 16
        %v297 = vshll.u32 %v293, 16
        %v298 = vshrl.u32 %v293, 16
        %vm299 = vc.u32 %v291, %v295
        %v300 = vsel %vm299, 1, 0
        %v301 = vadd.s32 %v291, %v295
        %v302 = vadd.s32 %v294, %v300
        %vm303 = vc.u32 %v301, %v297
        %v304 = vsel %vm303, 1, 0
        %v305 = vadd.s32 %v301, %v297
        %v306 = vadd.s32 %v302, %v304
        %v307 = vadd.s32 %v306, %v296
        %v308 = vadd.s32 %v307, %v298
        %v309 = vand.u32 %v286, 65535
        %v310 = vshrl.u32 %v286, 16
        %v311 = vand.u32 %v281, 65535
        %v312 = vshrl.u32 %v281, 16
        %v313 = vmul.u32 %v309, %v311
        %v314 = vmul.u32 %v309, %v312
        %v315 = vmul.u32 %v310, %v311
        %v316 = vmul.u32 %v310, %v312
        %v317 = vshll.u32 %v314, 16
        %v318 = vshrl.u32 %v314, 16
        %v319 = vshll.u32 %v315, 16
        %v320 = vshrl.u32 %v315, 16
        %vm321 = vc.u32 %v313, %v317
        %v322 = vsel %vm321, 1, 0
        %v323 = vadd.s32 %v313, %v317
        %v324 = vadd.s32 %v316, %v322
        %vm325 = vc.u32 %v323, %v319
        %v326 = vsel %vm325, 1, 0
        %v327 = vadd.s32 %v323, %v319
        %v328 = vadd.s32 %v324, %v326
        %v329 = vadd.s32 %v328, %v318
        %v330 = vadd.s32 %v329, %v320
        %v331 = vmul.u32 %v286, %v277
        %v332 = vadd.s32 %v308, %v327
        %vm333 = vc.u32 %v308, %v327
        %v334 = vadd.s32 %v330, 1
        %v335 = vsel %vm333, %v334, %v330
        %v336 = vadd.s32 %v331, %v335
        %v337 = vadd.s32 %v336, 536870912
        %v338 = vshrl.u32 %v337, 30
        %v339 = vshll.u32 %v338, 30
        %v340 = vsub.s32 %v336, %v339
        %vm341 = vcmp.lt.s32.totalorder %v340, 0
        %v342 = vsub.s32 0, %v340
        %v343 = vsel %vm341, %v342, %v340
        %v344 = vclz %v343
        %v345 = vsub.s32 %v344, 2
        %vm346 = vcmp.gt.s32.totalorder 0, %v345
        %v347 = vsel %vm346, 0, %v345
        %v348 = vsub.s32 32, %v347
        %v349 = vshll.u32 %v340, %v347
        %v350 = vshrl.u32 %v332, %v348
        %v351 = vor.u32 %v349, %v350
        %v352 = vsub.s32 4294967266, %v347
        %v353 = vadd.s32 %v352, 127
        %v354 = vshll.u32 %v353, 23
        %v355 = vor.u32 4788187, %v354
        %v356 = vand.u32 2147483647, %v355
        %v358 = vcvt.s32.f32 %v351
        %v359 = vmul.f32 %v358, %v356
        %v360 = vxor.u32 %v359, 2147483648
        %v361 = vsel %vm240, %v360, %v359
        %v362 = vsub.s32 4, %v338
        %v363 = vsel %vm240, %v362, %v338
        %v364 = vsel %vm239, %v234, %v361
        %v365 = vsel %vm239, 0, %v363
        %v366 = vmul.f32 %v364, %v364
        %v367 = vmul.f32 %v366, -0.001358992
        %v368 = vadd.f32 %v367, 0.041655596
        %v369 = vmul.f32 %v366, %v368
        %v370 = vadd.f32 %v369, -0.4999988
        %v371 = vmul.f32 %v366, %v370
        %v372 = vadd.f32 1.0, %v371
        %v373 = vmul.f32 %v364, %v364
        %v374 = vmul.f32 %v373, -0.00019511016
        %v375 = vadd.f32 %v374, 0.008332121
        %v376 = vmul.f32 %v373, %v375
        %v377 = vadd.f32 %v376, -0.16666654
        %v378 = vmul.f32 %v373, %v377
        %v379 = vadd.f32 %v378, 1.0
        %v380 = vmul.f32 %v379, %v364
        %vm381 = vweird.f32 %v234
        %v382 = vadd.s32 %v365, 3
        %v383 = vand.u32 %v382, 3
        %vm384 = vcmp.lt.s32.totalorder %v383, 2
        %vm385 = vcmp.eq.s32.totalorder %v383, 0
        %v386 = vxor.u32 %v380, 2147483648
        %v387 = vsel %vm385, %v372, %v386
        %vm388 = vcmp.eq.s32.totalorder %v383, 2
        %v389 = vxor.u32 %v372, 2147483648
        %v390 = vsel %vm388, %v389, %v380
        %v391 = vsel %vm384, %v387, %v390
        %v392 = vsel %vm381, nan, %v391
        %v393 = vand.u32 2147483647, %v235
        %vm394 = vcmp.le.f32.partialorder %v393, 0.7853982
        %vm395 = vcmp.lt.s32.totalorder %v235, 0
        %v396 = vand.u32 %v235, 2139095040
        %v397 = vshrl.u32 %v396, 23
        %v398 = vsub.s32 %v397, 127
        %v399 = vand.u32 2147483647, %v235
        %v400 = vand.u32 %v399, 8388607
        %v401 = vor.u32 %v400, 8388608
        %v402 = vsub.s32 0, %v401
        %v403 = vadd.s32 %v398, 1
        %vm404 = vcmp.gt.s32.totalorder %v403, 0
        %v405 = vsel %vm404, %v403, 0
        %v406 = vshrl.u32 %v405, 5
        %v407 = vand.u32 %v405, 31
        %v408 = vsub.s32 32, %v407
        %v409 = vshrl.u32 683565275, %v408
        %v410 = vshll.u32 683565275, %v407
        %v411 = vshrl.u32 2475754826, %v408
        %v412 = vor.u32 %v410, %v411
        %v413 = vshll.u32 2475754826, %v407
        %v414 = vshrl.u32 2131351028, %v408
        %v415 = vor.u32 %v413, %v414
        %v416 = vshll.u32 2131351028, %v407
        %v417 = vshrl.u32 2102212464, %v408
        %v418 = vor.u32 %v416, %v417
        %v419 = vshll.u32 2102212464, %v407
        %v420 = vshrl.u32 920167782, %v408
        %v421 = vor.u32 %v419, %v420
        %v422 = vshll.u32 920167782, %v407
        %v423 = vshrl.u32 1326507024, %v408
        %v424 = vor.u32 %v422, %v423
        %vm425 = vcmp.lt.s32.totalorder %v406, 1
        %vm426 = vcmp.lt.s32.totalorder %v406, 2
        %vm427 = vcmp.lt.s32.totalorder %v406, 3
        %vm428 = vcmp.lt.s32.totalorder %v406, 4
        %v429 = vsel %vm425, %v409, %v412
        %v430 = vsel %vm428, %v418, 2102212464
        %v431 = vsel %vm427, %v415, %v430
        %v432 = vsel %vm426, %v429, %v431
        %v433 = vsel %vm425, %v412, %v415
        %v434 = vsel %vm428, %v421, 920167782
        %v435 = vsel %vm427, %v418, %v434
        %v436 = vsel %vm426, %v433, %v435
        %v437 = vsel %vm425, %v415, %v418
        %v438 = vsel %vm428, %v424, 1326507024
        %v439 = vsel %vm427, %v421, %v438
        %v440 = vsel %vm426, %v437, %v439
        %v441 = vshll.u32 %v401, 8
        %v442 = vand.u32 %v441, 65535
        %v443 = vshrl.u32 %v441, 16
        %v444 = vand.u32 %v440, 65535
        %v445 = vshrl.u32 %v440, 16
        %v446 = vmul.u32 %v442, %v444
        %v447 = vmul.u32 %v442, %v445
        %v448 = vmul.u32 %v443, %v444
        %v449 = vmul.u32 %v443, %v445
        %v450 = vshll.u32 %v447, 16
        %v451 = vshrl.u32 %v447, 16
        %v452 = vshll.u32 %v448, 16
        %v453 = vshrl.u32 %v448, 16
        %vm454 = vc.u32 %v446, %v450
        %v455 = vsel %vm454, 1, 0
        %v456 = vadd.s32 %v446, %v450
        %v457 = vadd.s32 %v449, %v455
        %vm458 = vc.u32 %v456, %v452
        %v459 = vsel %vm458, 1, 0
        %v460 = vadd.s32 %v456, %v452
        %v461 = vadd.s32 %v457, %v459
        %v462 = vadd.s32 %v461, %v451
        %v463 = vadd.s32 %v462, %v453
        %v464 = vand.u32 %v441, 65535
        %v465 = vshrl.u32 %v441, 16
        %v466 = vand.u32 %v436, 65535
        %v467 = vshrl.u32 %v436, 16
        %v468 = vmul.u32 %v464, %v466
        %v469 = vmul.u32 %v464, %v467
        %v470 = vmul.u32 %v465, %v466
        %v471 = vmul.u32 %v465, %v467
        %v472 = vshll.u32 %v469, 16
        %v473 = vshrl.u32 %v469, 16
        %v474 = vshll.u32 %v470, 16
        %v475 = vshrl.u32 %v470, 16
        %vm476 = vc.u32 %v468, %v472
        %v477 = vsel %vm476, 1, 0
        %v478 = vadd.s32 %v468, %v472
        %v479 = vadd.s32 %v471, %v477
        %vm480 = vc.u32 %v478, %v474
        %v481 = vsel %vm480, 1, 0
        %v482 = vadd.s32 %v478, %v474
        %v483 = vadd.s32 %v479, %v481
        %v484 = vadd.s32 %v483, %v473
        %v485 = vadd.s32 %v484, %v475
        %v486 = vmul.u32 %v441, %v432
        %v487 = vadd.s32 %v463, %v482
        %vm488 = vc.u32 %v463, %v482
        %v489 = vadd.s32 %v485, 1
        %v490 = vsel %vm488, %v489, %v485
        %v491 = vadd.s32 %v486, %v490
        %v492 = vadd.s32 %v491, 536870912
        %v493 = vshrl.u32 %v492, 30
        %v494 = vshll.u32 %v493, 30
        %v495 = vsub.s32 %v491, %v494
        %vm496 = vcmp.lt.s32.totalorder %v495, 0
        %v497 = vsub.s32 0, %v495
        %v498 = vsel %vm496, %v497, %v495
        %v499 = vclz %v498
        %v500 = vsub.s32 %v499, 2
        %vm501 = vcmp.gt.s32.totalorder 0, %v500
        %v502 = vsel %vm501, 0, %v500
        %v503 = vsub.s32 32, %v502
        %v504 = vshll.u32 %v495, %v502
        %v505 = vshrl.u32 %v487, %v503
        %v506 = vor.u32 %v504, %v505
        %v507 = vsub.s32 4294967266, %v502
        %v508 = vadd.s32 %v507, 127
        %v509 = vshll.u32 %v508, 23
        %v510 = vor.u32 4788187, %v509
        %v511 = vand.u32 2147483647, %v510
        %v513 = vcvt.s32.f32 %v506
        %v514 = vmul.f32 %v513, %v511
        %v515 = vxor.u32 %v514, 2147483648
        %v516 = vsel %vm395, %v515, %v514
        %v517 = vsub.s32 4, %v493
        %v518 = vsel %vm395, %v517, %v493
        %v519 = vsel %vm394, %v235, %v516
        %v520 = vsel %vm394, 0, %v518
        %v521 = vmul.f32 %v519, %v519
        %v522 = vmul.f32 %v521, -0.001358992
        %v523 = vadd.f32 %v522, 0.041655596
        %v524 = vmul.f32 %v521, %v523
        %v525 = vadd.f32 %v524, -0.4999988
        %v526 = vmul.f32 %v521, %v525
        %v527 = vadd.f32 1.0, %v526
        %v528 = vmul.f32 %v519, %v519
        %v529 = vmul.f32 %v528, -0.00019511016
        %v530 = vadd.f32 %v529, 0.008332121
        %v531 = vmul.f32 %v528, %v530
        %v532 = vadd.f32 %v531, -0.16666654
        %v533 = vmul.f32 %v528, %v532
        %v534 = vadd.f32 %v533, 1.0
        %v535 = vmul.f32 %v534, %v519
        %vm536 = vweird.f32 %v235
        %v537 = vadd.s32 %v520, 3
        %v538 = vand.u32 %v537, 3
        %vm539 = vcmp.lt.s32.totalorder %v538, 2
        %vm540 = vcmp.eq.s32.totalorder %v538, 0
        %v541 = vxor.u32 %v535, 2147483648
        %v542 = vsel %vm540, %v527, %v541
        %vm543 = vcmp.eq.s32.totalorder %v538, 2
        %v544 = vxor.u32 %v527, 2147483648
        %v545 = vsel %vm543, %v544, %v535
        %v546 = vsel %vm539, %v542, %v545
        %v547 = vsel %vm536, nan, %v546
        %v548 = vand.u32 2147483647, %v236
        %vm549 = vcmp.le.f32.partialorder %v548, 0.7853982
        %vm550 = vcmp.lt.s32.totalorder %v236, 0
        %v551 = vand.u32 %v236, 2139095040
        %v552 = vshrl.u32 %v551, 23
        %v553 = vsub.s32 %v552, 127
        %v554 = vand.u32 2147483647, %v236
        %v555 = vand.u32 %v554, 8388607
        %v556 = vor.u32 %v555, 8388608
        %v557 = vsub.s32 0, %v556
        %v558 = vadd.s32 %v553, 1
        %vm559 = vcmp.gt.s32.totalorder %v558, 0
        %v560 = vsel %vm559, %v558, 0
        %v561 = vshrl.u32 %v560, 5
        %v562 = vand.u32 %v560, 31
        %v563 = vsub.s32 32, %v562
        %v564 = vshrl.u32 683565275, %v563
        %v565 = vshll.u32 683565275, %v562
        %v566 = vshrl.u32 2475754826, %v563
        %v567 = vor.u32 %v565, %v566
        %v568 = vshll.u32 2475754826, %v562
        %v569 = vshrl.u32 2131351028, %v563
        %v570 = vor.u32 %v568, %v569
        %v571 = vshll.u32 2131351028, %v562
        %v572 = vshrl.u32 2102212464, %v563
        %v573 = vor.u32 %v571, %v572
        %v574 = vshll.u32 2102212464, %v562
        %v575 = vshrl.u32 920167782, %v563
        %v576 = vor.u32 %v574, %v575
        %v577 = vshll.u32 920167782, %v562
        %v578 = vshrl.u32 1326507024, %v563
        %v579 = vor.u32 %v577, %v578
        %vm580 = vcmp.lt.s32.totalorder %v561, 1
        %vm581 = vcmp.lt.s32.totalorder %v561, 2
        %vm582 = vcmp.lt.s32.totalorder %v561, 3
        %vm583 = vcmp.lt.s32.totalorder %v561, 4
        %v584 = vsel %vm580, %v564, %v567
        %v585 = vsel %vm583, %v573, 2102212464
        %v586 = vsel %vm582, %v570, %v585
        %v587 = vsel %vm581, %v584, %v586
        %v588 = vsel %vm580, %v567, %v570
        %v589 = vsel %vm583, %v576, 920167782
        %v590 = vsel %vm582, %v573, %v589
        %v591 = vsel %vm581, %v588, %v590
        %v592 = vsel %vm580, %v570, %v573
        %v593 = vsel %vm583, %v579, 1326507024
        %v594 = vsel %vm582, %v576, %v593
        %v595 = vsel %vm581, %v592, %v594
        %v596 = vshll.u32 %v556, 8
        %v597 = vand.u32 %v596, 65535
        %v598 = vshrl.u32 %v596, 16
        %v599 = vand.u32 %v595, 65535
        %v600 = vshrl.u32 %v595, 16
        %v601 = vmul.u32 %v597, %v599
        %v602 = vmul.u32 %v597, %v600
        %v603 = vmul.u32 %v598, %v599
        %v604 = vmul.u32 %v598, %v600
        %v605 = vshll.u32 %v602, 16
        %v606 = vshrl.u32 %v602, 16
        %v607 = vshll.u32 %v603, 16
        %v608 = vshrl.u32 %v603, 16
        %vm609 = vc.u32 %v601, %v605
        %v610 = vsel %vm609, 1, 0
        %v611 = vadd.s32 %v601, %v605
        %v612 = vadd.s32 %v604, %v610
        %vm613 = vc.u32 %v611, %v607
        %v614 = vsel %vm613, 1, 0
        %v615 = vadd.s32 %v611, %v607
        %v616 = vadd.s32 %v612, %v614
        %v617 = vadd.s32 %v616, %v606
        %v618 = vadd.s32 %v617, %v608
        %v619 = vand.u32 %v596, 65535
        %v620 = vshrl.u32 %v596, 16
        %v621 = vand.u32 %v591, 65535
        %v622 = vshrl.u32 %v591, 16
        %v623 = vmul.u32 %v619, %v621
        %v624 = vmul.u32 %v619, %v622
        %v625 = vmul.u32 %v620, %v621
        %v626 = vmul.u32 %v620, %v622
        %v627 = vshll.u32 %v624, 16
        %v628 = vshrl.u32 %v624, 16
        %v629 = vshll.u32 %v625, 16
        %v630 = vshrl.u32 %v625, 16
        %vm631 = vc.u32 %v623, %v627
        %v632 = vsel %vm631, 1, 0
        %v633 = vadd.s32 %v623, %v627
        %v634 = vadd.s32 %v626, %v632
        %vm635 = vc.u32 %v633, %v629
        %v636 = vsel %vm635, 1, 0
        %v637 = vadd.s32 %v633, %v629
        %v638 = vadd.s32 %v634, %v636
        %v639 = vadd.s32 %v638, %v628
        %v640 = vadd.s32 %v639, %v630
        %v641 = vmul.u32 %v596, %v587
        %v642 = vadd.s32 %v618, %v637
        %vm643 = vc.u32 %v618, %v637
        %v644 = vadd.s32 %v640, 1
        %v645 = vsel %vm643, %v644, %v640
        %v646 = vadd.s32 %v641, %v645
        %v647 = vadd.s32 %v646, 536870912
        %v648 = vshrl.u32 %v647, 30
        %v649 = vshll.u32 %v648, 30
        %v650 = vsub.s32 %v646, %v649
        %vm651 = vcmp.lt.s32.totalorder %v650, 0
        %v652 = vsub.s32 0, %v650
        %v653 = vsel %vm651, %v652, %v650
        %v654 = vclz %v653
        %v655 = vsub.s32 %v654, 2
        %vm656 = vcmp.gt.s32.totalorder 0, %v655
        %v657 = vsel %vm656, 0, %v655
        %v658 = vsub.s32 32, %v657
        %v659 = vshll.u32 %v650, %v657
        %v660 = vshrl.u32 %v642, %v658
        %v661 = vor.u32 %v659, %v660
        %v662 = vsub.s32 4294967266, %v657
        %v663 = vadd.s32 %v662, 127
        %v664 = vshll.u32 %v663, 23
        %v665 = vor.u32 4788187, %v664
        %v666 = vand.u32 2147483647, %v665
        %v668 = vcvt.s32.f32 %v661
        %v669 = vmul.f32 %v668, %v666
        %v670 = vxor.u32 %v669, 2147483648
        %v671 = vsel %vm550, %v670, %v669
        %v672 = vsub.s32 4, %v648
        %v673 = vsel %vm550, %v672, %v648
        %v674 = vsel %vm549, %v236, %v671
        %v675 = vsel %vm549, 0, %v673
        %v676 = vmul.f32 %v674, %v674
        %v677 = vmul.f32 %v676, -0.001358992
        %v678 = vadd.f32 %v677, 0.041655596
        %v679 = vmul.f32 %v676, %v678
        %v680 = vadd.f32 %v679, -0.4999988
        %v681 = vmul.f32 %v676, %v680
        %v682 = vadd.f32 1.0, %v681
        %v683 = vmul.f32 %v674, %v674
        %v684 = vmul.f32 %v683, -0.00019511016
        %v685 = vadd.f32 %v684, 0.008332121
        %v686 = vmul.f32 %v683, %v685
        %v687 = vadd.f32 %v686, -0.16666654
        %v688 = vmul.f32 %v683, %v687
        %v689 = vadd.f32 %v688, 1.0
        %v690 = vmul.f32 %v689, %v674
        %vm691 = vweird.f32 %v236
        %v692 = vadd.s32 %v675, 3
        %v693 = vand.u32 %v692, 3
        %vm694 = vcmp.lt.s32.totalorder %v693, 2
        %vm695 = vcmp.eq.s32.totalorder %v693, 0
        %v696 = vxor.u32 %v690, 2147483648
        %v697 = vsel %vm695, %v682, %v696
        %vm698 = vcmp.eq.s32.totalorder %v693, 2
        %v699 = vxor.u32 %v682, 2147483648
        %v700 = vsel %vm698, %v699, %v690
        %v701 = vsel %vm694, %v697, %v700
        %v702 = vsel %vm691, nan, %v701
        %v703 = vand.u32 2147483647, %v237
        %vm704 = vcmp.le.f32.partialorder %v703, 0.7853982
        %vm705 = vcmp.lt.s32.totalorder %v237, 0
        %v706 = vand.u32 %v237, 2139095040
        %v707 = vshrl.u32 %v706, 23
        %v708 = vsub.s32 %v707, 127
        %v709 = vand.u32 2147483647, %v237
        %v710 = vand.u32 %v709, 8388607
        %v711 = vor.u32 %v710, 8388608
        %v712 = vsub.s32 0, %v711
        %v713 = vadd.s32 %v708, 1
        %vm714 = vcmp.gt.s32.totalorder %v713, 0
        %v715 = vsel %vm714, %v713, 0
        %v716 = vshrl.u32 %v715, 5
        %v717 = vand.u32 %v715, 31
        %v718 = vsub.s32 32, %v717
        %v719 = vshrl.u32 683565275, %v718
        %v720 = vshll.u32 683565275, %v717
        %v721 = vshrl.u32 2475754826, %v718
        %v722 = vor.u32 %v720, %v721
        %v723 = vshll.u32 2475754826, %v717
        %v724 = vshrl.u32 2131351028, %v718
        %v725 = vor.u32 %v723, %v724
        %v726 = vshll.u32 2131351028, %v717
        %v727 = vshrl.u32 2102212464, %v718
        %v728 = vor.u32 %v726, %v727
        %v729 = vshll.u32 2102212464, %v717
        %v730 = vshrl.u32 920167782, %v718
        %v731 = vor.u32 %v729, %v730
        %v732 = vshll.u32 920167782, %v717
        %v733 = vshrl.u32 1326507024, %v718
        %v734 = vor.u32 %v732, %v733
        %vm735 = vcmp.lt.s32.totalorder %v716, 1
        %vm736 = vcmp.lt.s32.totalorder %v716, 2
        %vm737 = vcmp.lt.s32.totalorder %v716, 3
        %vm738 = vcmp.lt.s32.totalorder %v716, 4
        %v739 = vsel %vm735, %v719, %v722
        %v740 = vsel %vm738, %v728, 2102212464
        %v741 = vsel %vm737, %v725, %v740
        %v742 = vsel %vm736, %v739, %v741
        %v743 = vsel %vm735, %v722, %v725
        %v744 = vsel %vm738, %v731, 920167782
        %v745 = vsel %vm737, %v728, %v744
        %v746 = vsel %vm736, %v743, %v745
        %v747 = vsel %vm735, %v725, %v728
        %v748 = vsel %vm738, %v734, 1326507024
        %v749 = vsel %vm737, %v731, %v748
        %v750 = vsel %vm736, %v747, %v749
        %v751 = vshll.u32 %v711, 8
        %v752 = vand.u32 %v751, 65535
        %v753 = vshrl.u32 %v751, 16
        %v754 = vand.u32 %v750, 65535
        %v755 = vshrl.u32 %v750, 16
        %v756 = vmul.u32 %v752, %v754
        %v757 = vmul.u32 %v752, %v755
        %v758 = vmul.u32 %v753, %v754
        %v759 = vmul.u32 %v753, %v755
        %v760 = vshll.u32 %v757, 16
        %v761 = vshrl.u32 %v757, 16
        %v762 = vshll.u32 %v758, 16
        %v763 = vshrl.u32 %v758, 16
        %vm764 = vc.u32 %v756, %v760
        %v765 = vsel %vm764, 1, 0
        %v766 = vadd.s32 %v756, %v760
        %v767 = vadd.s32 %v759, %v765
        %vm768 = vc.u32 %v766, %v762
        %v769 = vsel %vm768, 1, 0
        %v770 = vadd.s32 %v766, %v762
        %v771 = vadd.s32 %v767, %v769
        %v772 = vadd.s32 %v771, %v761
        %v773 = vadd.s32 %v772, %v763
        %v774 = vand.u32 %v751, 65535
        %v775 = vshrl.u32 %v751, 16
        %v776 = vand.u32 %v746, 65535
        %v777 = vshrl.u32 %v746, 16
        %v778 = vmul.u32 %v774, %v776
        %v779 = vmul.u32 %v774, %v777
        %v780 = vmul.u32 %v775, %v776
        %v781 = vmul.u32 %v775, %v777
        %v782 = vshll.u32 %v779, 16
        %v783 = vshrl.u32 %v779, 16
        %v784 = vshll.u32 %v780, 16
        %v785 = vshrl.u32 %v780, 16
        %vm786 = vc.u32 %v778, %v782
        %v787 = vsel %vm786, 1, 0
        %v788 = vadd.s32 %v778, %v782
        %v789 = vadd.s32 %v781, %v787
        %vm790 = vc.u32 %v788, %v784
        %v791 = vsel %vm790, 1, 0
        %v792 = vadd.s32 %v788, %v784
        %v793 = vadd.s32 %v789, %v791
        %v794 = vadd.s32 %v793, %v783
        %v795 = vadd.s32 %v794, %v785
        %v796 = vmul.u32 %v751, %v742
        %v797 = vadd.s32 %v773, %v792
        %vm798 = vc.u32 %v773, %v792
        %v799 = vadd.s32 %v795, 1
        %v800 = vsel %vm798, %v799, %v795
        %v801 = vadd.s32 %v796, %v800
        %v802 = vadd.s32 %v801, 536870912
        %v803 = vshrl.u32 %v802, 30
        %v804 = vshll.u32 %v803, 30
        %v805 = vsub.s32 %v801, %v804
        %vm806 = vcmp.lt.s32.totalorder %v805, 0
        %v807 = vsub.s32 0, %v805
        %v808 = vsel %vm806, %v807, %v805
        %v809 = vclz %v808
        %v810 = vsub.s32 %v809, 2
        %vm811 = vcmp.gt.s32.totalorder 0, %v810
        %v812 = vsel %vm811, 0, %v810
        %v813 = vsub.s32 32, %v812
        %v814 = vshll.u32 %v805, %v812
        %v815 = vshrl.u32 %v797, %v813
        %v816 = vor.u32 %v814, %v815
        %v817 = vsub.s32 4294967266, %v812
        %v818 = vadd.s32 %v817, 127
        %v819 = vshll.u32 %v818, 23
        %v820 = vor.u32 4788187, %v819
        %v821 = vand.u32 2147483647, %v820
        %v823 = vcvt.s32.f32 %v816
        %v824 = vmul.f32 %v823, %v821
        %v825 = vxor.u32 %v824, 2147483648
        %v826 = vsel %vm705, %v825, %v824
        %v827 = vsub.s32 4, %v803
        %v828 = vsel %vm705, %v827, %v803
        %v829 = vsel %vm704, %v237, %v826
        %v830 = vsel %vm704, 0, %v828
        %v831 = vmul.f32 %v829, %v829
        %v832 = vmul.f32 %v831, -0.001358992
        %v833 = vadd.f32 %v832, 0.041655596
        %v834 = vmul.f32 %v831, %v833
        %v835 = vadd.f32 %v834, -0.4999988
        %v836 = vmul.f32 %v831, %v835
        %v837 = vadd.f32 1.0, %v836
        %v838 = vmul.f32 %v829, %v829
        %v839 = vmul.f32 %v838, -0.00019511016
        %v840 = vadd.f32 %v839, 0.008332121
        %v841 = vmul.f32 %v838, %v840
        %v842 = vadd.f32 %v841, -0.16666654
        %v843 = vmul.f32 %v838, %v842
        %v844 = vadd.f32 %v843, 1.0
        %v845 = vmul.f32 %v844, %v829
        %vm846 = vweird.f32 %v237
        %v847 = vadd.s32 %v830, 3
        %v848 = vand.u32 %v847, 3
        %vm849 = vcmp.lt.s32.totalorder %v848, 2
        %vm850 = vcmp.eq.s32.totalorder %v848, 0
        %v851 = vxor.u32 %v845, 2147483648
        %v852 = vsel %vm850, %v837, %v851
        %vm853 = vcmp.eq.s32.totalorder %v848, 2
        %v854 = vxor.u32 %v837, 2147483648
        %v855 = vsel %vm853, %v854, %v845
        %v856 = vsel %vm849, %v852, %v855
        %v857 = vsel %vm846, nan, %v856
        %858 = vst [vmem:[%s185] sm:$0xff] %v392
        %859 = vst [vmem:[%s185 + $0x8] sm:$0xff] %v547
        %860 = vst [vmem:[%s185 + $0x10] sm:$0xff] %v702
        %861 = vst [vmem:[%s185 + $0x18] sm:$0xff] %v857
        %p862 = scmp.lt.s32.totalorder %s18, 1
        %s863 = scalar_select %p862, %s18, 1
        %p864 = scmp.lt.s32.totalorder %s19, 0
        %s865 = scalar_select %p864, %s19, 0
        %s866 = smul.addr %s863, 4
        %s867 = sadd.s32 %s865, %s866
        %s868 = smul.addr %s867, 8
        %s869 = scalar_lea.vmem %s2, %s868
        // Predicated region
        $region33: #{side_encoder_forward.1} parent=27 // pred_check
          %p870 = pneg %p95
        $region34: #{side_encoder_forward.1} parent=27 // pred_check_branch
          %872 = sbr.rel (%p870) target = $region36
        $region35: #{side_encoder_forward.1} parent=27 // pred_region
          _
        $region36: #{side_encoder_forward.1} parent=27 // pred_fallthru
          _
      $region28: #{side_encoder_forward.1} parent=5 // pred_fallthru
        _
      %p873 = scmp.le.s32.totalorder 2, %s9
      // Predicated region
      $region37: #{side_encoder_forward.1} parent=5 // pred_check
        %p874 = pneg %p873
      $region38: #{side_encoder_forward.1} parent=5 // pred_check_branch
        %876 = sbr.rel (%p874) target = $region40
      $region39: #{side_encoder_forward.1} parent=5 // pred_region
        %s877 = ssub.s32 %s9, 2
        // Predicated region
        $region41: #{side_encoder_forward.1} parent=39 // pred_check
          %p878 = pneg %p101
        $region42: #{side_encoder_forward.1} parent=39 // pred_check_branch
          %880 = sbr.rel (%p878) target = $region44
        $region43: #{side_encoder_forward.1} parent=39 // pred_region
          %p881 = scmp.lt.s32.totalorder %s20, 1
          %s882 = scalar_select %p881, %s20, 1
          %p883 = scmp.lt.s32.totalorder %s21, 0
          %s884 = scalar_select %p883, %s21, 0
          %s885 = smul.addr %s882, 4
          %s886 = sadd.s32 %s884, %s885
          %s887 = smul.addr %s886, 8
          %s888 = scalar_lea.vmem %s2, %s887
        $region44: #{side_encoder_forward.1} parent=39 // pred_fallthru
          _
      $region40: #{side_encoder_forward.1} parent=5 // pred_fallthru
        _
    $region6: #{side_encoder_forward.1} parent=1 // loop_footer
      %s13 = sadd.s32 1, %s9
    $region7: #{side_encoder_forward.1} parent=1 // loop_footer_branch
      %8 = sbr.rel target = $region3
    $region8: #{side_encoder_forward.1} parent=1 // loop_exit
      _
    %889 = vsyncpa [#allocation3], 1
    %s890 = scalar_lea.sflag [#allocation3], 1
    %891 = vsyncpa %s890, 1

</llo_original>
